<compile_context>
chip_gen: v5e
topology: v5e:2x2
jax: 0.10.0
libtpu: 0.0.40
codegen_flags: <defaults>
</compile_context>

<pallas_src>
import functools

import jax
import jax.numpy as jnp
from jax.experimental import pallas as pl
from jax.experimental.pallas import tpu as pltpu

IN_DIM = 20
HID_DIM = 256
OUT_DIM = 10
LANE = 128


def _round_up(x, m):
    return (x + m - 1) // m * m


def mlp_kernel(x_ref, w1_ref, b1_ref, w2_ref, b2_ref, o_ref):
    # Hidden layer: bf16 x bf16 -> f32 on the MXU; bias add + ReLU in f32 (VPU).
    h = jnp.dot(x_ref[...], w1_ref[...], preferred_element_type=jnp.float32)
    h = jnp.maximum(h + b1_ref[...], 0.0)
    # Output layer: cast activations back to bf16 for the MXU, accumulate f32.
    y = jnp.dot(h.astype(w2_ref.dtype), w2_ref[...],
                preferred_element_type=jnp.float32)
    o_ref[...] = (y + b2_ref[...]).astype(o_ref.dtype)


def _pick_tile_b(batch):
    """Largest batch tile that comfortably fits VMEM on this TPU generation."""
    # Per-row working set (double-buffered x/out tiles + f32 hidden) ~2.5 KiB;
    # tiles past ~1-2K rows give no extra roofline but eat VMEM headroom.
    cap = 2048  # safe for v7x's 64 MiB VMEM
    try:
        if pltpu.get_tpu_info().vmem_capacity_bytes >= 96 * 1024 * 1024:
            cap = 4096  # v5e / v6e have 128 MiB VMEM
    except Exception:
        pass
    return min(cap, _round_up(batch, 8))


def mlp_forward(x, w1, b1, w2, b2, *, tile_b=None):
    B, in_dim = x.shape
    hid = w1.shape[1]
    out_dim = w2.shape[1]
    out_pad = _round_up(max(out_dim, LANE), LANE)  # lane-dense output width

    # ---- wrapper-side layout / dtype prep (bf16 MXU operands, padded W2/b2) ----
    xb = x.astype(jnp.bfloat16)
    w1b = w1.astype(jnp.bfloat16)
    w2b = jnp.zeros((hid, out_pad), jnp.bfloat16).at[:, :out_dim].set(
        w2.astype(jnp.bfloat16))
    b1f = b1.reshape(1, hid).astype(jnp.float32)
    b2f = jnp.zeros((1, out_pad), jnp.float32).at[:, :out_dim].set(
        b2.reshape(1, out_dim).astype(jnp.float32))

    # ---- batch tiling ----
    if tile_b is None:
        tile_b = _pick_tile_b(B)
    tile_b = max(8, _round_up(min(tile_b, _round_up(B, 8)), 8))
    b_pad = _round_up(B, tile_b)
    if b_pad != B:
        xb = jnp.pad(xb, ((0, b_pad - B), (0, 0)))
    grid = (b_pad // tile_b,)

    flops = 2 * b_pad * (in_dim * hid + hid * out_pad)
    bytes_accessed = (xb.size * 2 + w1b.size * 2 + w2b.size * 2
                      + b1f.size * 4 + b2f.size * 4 + b_pad * out_pad * 4)

    out = pl.pallas_call(
        mlp_kernel,
        out_shape=jax.ShapeDtypeStruct((b_pad, out_pad), jnp.float32),
        grid=grid,
        in_specs=[
            pl.BlockSpec((tile_b, in_dim), lambda i: (i, 0)),  # x: tiled on batch
            pl.BlockSpec((in_dim, hid), lambda i: (0, 0)),     # W1: VMEM-resident
            pl.BlockSpec((1, hid), lambda i: (0, 0)),          # b1
            pl.BlockSpec((hid, out_pad), lambda i: (0, 0)),    # W2 (lane-padded)
            pl.BlockSpec((1, out_pad), lambda i: (0, 0)),      # b2 (lane-padded)
        ],
        out_specs=pl.BlockSpec((tile_b, out_pad), lambda i: (i, 0)),
        compiler_params=pltpu.CompilerParams(
            dimension_semantics=("parallel",),   # lets v7x use both TensorCores
            vmem_limit_bytes=48 * 1024 * 1024,
        ),
        cost_estimate=pl.CostEstimate(
            flops=flops, transcendentals=0, bytes_accessed=bytes_accessed),
    )(xb, w1b, b1f, w2b, b2f)

    # TODO(synk): for tiny-batch serving, keep W1/W2 resident across calls via a
    # cross-pallas_call weight-prefetch pattern instead of re-fetching from HBM.
    return out[:B, :out_dim]


def init_params(key, in_dim=IN_DIM, hidden_dim=HID_DIM, out_dim=OUT_DIM,
                dtype=jnp.float32):
    # Mirrors PyTorch nn.Linear's uniform(-1/sqrt(fan_in), 1/sqrt(fan_in)).
    k1, k2, k3, k4 = jax.random.split(key, 4)
    bound1 = 1.0 / jnp.sqrt(in_dim)
    bound2 = 1.0 / jnp.sqrt(hidden_dim)
    w1 = jax.random.uniform(k1, (in_dim, hidden_dim), dtype, -bound1, bound1)
    b1 = jax.random.uniform(k2, (1, hidden_dim), dtype, -bound1, bound1)
    w2 = jax.random.uniform(k3, (hidden_dim, out_dim), dtype, -bound2, bound2)
    b2 = jax.random.uniform(k4, (1, out_dim), dtype, -bound2, bound2)
    return w1, b1, w2, b2


if __name__ == "__main__":
    key = jax.random.PRNGKey(0)
    k_x, k_p = jax.random.split(key)

    B = 72  # deliberately not a multiple of the tile -> exercises batch padding
    x = jax.random.normal(k_x, (B, IN_DIM), jnp.float32)
    w1, b1, w2, b2 = init_params(k_p)

    # Small explicit tile so the batch grid (grid=(3,)) and pipelining are used.
    fwd = jax.jit(functools.partial(mlp_forward, tile_b=32))
    out = jax.block_until_ready(fwd(x, w1, b1, w2, b2))

    # Reference with matching bf16 input quantization, f32 accumulation.
    q = lambda a: a.astype(jnp.bfloat16).astype(jnp.float32)
    h_ref = jnp.maximum(q(x) @ q(w1) + b1, 0.0)
    ref = q(h_ref) @ q(w2) + b2

    assert out.shape == (B, OUT_DIM)
    assert jnp.allclose(out, ref, atol=2e-3, rtol=2e-3), float(
        jnp.max(jnp.abs(out - ref)))

    print("KERNEL_OK")
</pallas_src>

<mosaic_0001>
module attributes {stable_mosaic.version = 11 : i64} {
  func.func @mlp_kernel(%arg0: i32, %arg1: memref<32x20xbf16, #tpu.memory_space<vmem>>, %arg2: memref<20x256xbf16, #tpu.memory_space<vmem>>, %arg3: memref<1x256xf32, #tpu.memory_space<vmem>>, %arg4: memref<256x128xbf16, #tpu.memory_space<vmem>>, %arg5: memref<1x128xf32, #tpu.memory_space<vmem>>, %arg6: memref<32x128xf32, #tpu.memory_space<vmem>>) attributes {dimension_semantics = [#tpu.dimension_semantics<parallel>], iteration_bounds = array<i64: 3>, scalar_prefetch = 0 : i64, scratch_operands = 0 : i64, tpu.core_type = #tpu.core_type<tc>, window_params = [{transform_indices = @transform_0, window_bounds = array<i64: 32, 20>}, {pipeline_mode = #tpu.pipeline_mode<synchronous>, transform_indices = @transform_1, window_bounds = array<i64: 20, 256>}, {pipeline_mode = #tpu.pipeline_mode<synchronous>, transform_indices = @transform_2, window_bounds = array<i64: 1, 256>}, {pipeline_mode = #tpu.pipeline_mode<synchronous>, transform_indices = @transform_3, window_bounds = array<i64: 256, 128>}, {pipeline_mode = #tpu.pipeline_mode<synchronous>, transform_indices = @transform_4, window_bounds = array<i64: 1, 128>}, {transform_indices = @transform_5, window_bounds = array<i64: 32, 128>}]} {
    %c0 = arith.constant 0 : index
    %c0_0 = arith.constant 0 : index
    %0 = vector.load %arg1[%c0, %c0_0] : memref<32x20xbf16, #tpu.memory_space<vmem>>, vector<32x20xbf16>
    %c0_1 = arith.constant 0 : index
    %c0_2 = arith.constant 0 : index
    %1 = vector.load %arg2[%c0_1, %c0_2] : memref<20x256xbf16, #tpu.memory_space<vmem>>, vector<20x256xbf16>
    %cst = arith.constant dense<0.000000e+00> : vector<32x256xf32>
    %2 = tpu.matmul %0, %1, %cst {dimension_numbers = #tpu.dot_dimension_numbers<[1], [0], [0], [1], [0, 0, 1, 1], [], []>} : vector<32x20xbf16>, vector<20x256xbf16>, vector<32x256xf32> -> vector<32x256xf32>
    %c0_3 = arith.constant 0 : index
    %c0_4 = arith.constant 0 : index
    %3 = vector.load %arg3[%c0_3, %c0_4] : memref<1x256xf32, #tpu.memory_space<vmem>>, vector<1x256xf32>
    %4 = vector.broadcast %3 : vector<1x256xf32> to vector<32x256xf32>
    %5 = arith.addf %2, %4 : vector<32x256xf32>
    %cst_5 = arith.constant 0.000000e+00 : f32
    %6 = vector.broadcast %cst_5 : f32 to vector<32x256xf32>
    %7 = arith.maximumf %5, %6 : vector<32x256xf32>
    %8 = arith.truncf %7 : vector<32x256xf32> to vector<32x256xbf16>
    %c0_6 = arith.constant 0 : index
    %c0_7 = arith.constant 0 : index
    %9 = vector.load %arg4[%c0_6, %c0_7] : memref<256x128xbf16, #tpu.memory_space<vmem>>, vector<256x128xbf16>
    %cst_8 = arith.constant dense<0.000000e+00> : vector<32x128xf32>
    %10 = tpu.matmul %8, %9, %cst_8 {dimension_numbers = #tpu.dot_dimension_numbers<[1], [0], [0], [1], [0, 0, 1, 1], [], []>} : vector<32x256xbf16>, vector<256x128xbf16>, vector<32x128xf32> -> vector<32x128xf32>
    %c0_9 = arith.constant 0 : index
    %c0_10 = arith.constant 0 : index
    %11 = vector.load %arg5[%c0_9, %c0_10] : memref<1x128xf32, #tpu.memory_space<vmem>>, vector<1x128xf32>
    %12 = vector.broadcast %11 : vector<1x128xf32> to vector<32x128xf32>
    %13 = arith.addf %10, %12 : vector<32x128xf32>
    %c0_11 = arith.constant 0 : index
    %c0_12 = arith.constant 0 : index
    %14 = vector.load %arg6[%c0_11, %c0_12] : memref<32x128xf32, #tpu.memory_space<vmem>>, vector<32x128xf32>
    tpu.vector_store %arg6[%c0_11, %c0_12], %13 {strides = array<i32>} : memref<32x128xf32, #tpu.memory_space<vmem>>, vector<32x128xf32>,
    return
  }
  func.func @transform_0(%arg0: i32) -> (i32, i32) {
    %c0_i32 = arith.constant 0 : i32
    %c0_i32_0 = arith.constant 0 : i32
    return %arg0, %c0_i32 : i32, i32
  }
  func.func @transform_1(%arg0: i32) -> (i32, i32) {
    %c0_i32 = arith.constant 0 : i32
    %c0_i32_0 = arith.constant 0 : i32
    %c0_i32_1 = arith.constant 0 : i32
    return %c0_i32, %c0_i32_0 : i32, i32
  }
  func.func @transform_2(%arg0: i32) -> (i32, i32) {
    %c0_i32 = arith.constant 0 : i32
    %c0_i32_0 = arith.constant 0 : i32
    %c0_i32_1 = arith.constant 0 : i32
    return %c0_i32, %c0_i32_0 : i32, i32
  }
  func.func @transform_3(%arg0: i32) -> (i32, i32) {
    %c0_i32 = arith.constant 0 : i32
    %c0_i32_0 = arith.constant 0 : i32
    %c0_i32_1 = arith.constant 0 : i32
    return %c0_i32, %c0_i32_0 : i32, i32
  }
  func.func @transform_4(%arg0: i32) -> (i32, i32) {
    %c0_i32 = arith.constant 0 : i32
    %c0_i32_0 = arith.constant 0 : i32
    %c0_i32_1 = arith.constant 0 : i32
    return %c0_i32, %c0_i32_0 : i32, i32
  }
  func.func @transform_5(%arg0: i32) -> (i32, i32) {
    %c0_i32 = arith.constant 0 : i32
    %c0_i32_0 = arith.constant 0 : i32
    return %arg0, %c0_i32 : i32, i32
  }
}

</mosaic_0001>

<llo_original>
// kernel: mlp_forward.1
$region0: #{mlp_forward.1}
  #allocation0 [shape = 'u32[]', space=smem, size = 0x4, offset = 0x4, fixed_abs, tag = 'smem constant byte address 0x4 - core index']
  #allocation1 [shape = 'u32[72,128]{1,0:T(1,128)}', space=vmem, size = 0x9000, scoped, tag = 'internal scratch']
  %s0 = inlined_call_operand.vmem [shape: bf16[96,20], index: 0, kind: input, shape index: {}]
  %s1 = inlined_call_operand.vmem [shape: bf16[20,256], index: 1, kind: input, shape index: {}]
  %s2 = inlined_call_operand.vmem [shape: f32[1,256], index: 2, kind: input, shape index: {}]
  %s3 = inlined_call_operand.vmem [shape: bf16[256,128], index: 3, kind: input, shape index: {}]
  %s4 = inlined_call_operand.vmem [shape: f32[1,128], index: 4, kind: input, shape index: {}]
  %s5 = inlined_call_operand.vmem [shape: f32[96,128], index: 5, kind: output, shape index: {}]
  %s6 = sld [smem:[#allocation0]]
  $region53: #{mlp_forward.1} parent=0
    _
  %s8 = ssub.s32 1, %s6
  %s9 = scalar_select 0, %s8, %s6
  loop: start=0, step=1, limit=5
  $region2: #{mlp_forward.1} parent=0 // loop_pre_header
    _
  $region3: #{mlp_forward.1} parent=0 // loop_header
    %s11 = sphi 0, %s15
    %p12 = scmp.ge.s32.totalorder %s11, 5
    %s21 = sphi 0, %s23
    %s24 = sphi 0, %s21
    %s25 = sphi 0, %s24
    %s41 = sphi 0, %s25
    %s45 = sphi 0, %s45
    %s47 = sphi 0, %s45
    %s48 = sphi 0, %s47
    %s62 = sphi 0, %s48
    %s66 = sphi 0, %s66
    %s68 = sphi 0, %s66
    %s69 = sphi 0, %s68
    %s83 = sphi 0, %s69
    %s87 = sphi 0, %s87
    %s89 = sphi 0, %s87
    %s90 = sphi 0, %s89
    %s104 = sphi 0, %s90
    %s108 = sphi 0, %s108
    %s110 = sphi 0, %s108
    %s111 = sphi 0, %s110
    %s125 = sphi 0, %s111
    %s131 = sphi 0, %s133
    %s134 = sphi 0, %s131
    %s135 = sphi 0, %s134
    %s151 = sphi 0, %s135
  $region4: #{mlp_forward.1} parent=0 // loop_header_branch
    %14 = sbr.rel (%p12) target = $region8
  $region5: #{mlp_forward.1} parent=0 // loop_body
    %s16 = ssub.s32 %s11, 1
    %s17 = ssub.s32 %s11, 2
    %s18 = sadd.s32 %s11, 1
    %s19 = ssub.s32 %s11, %s18
    %p20 = scmp.eq.s32.totalorder %s19, 0
    %s22 = sadd.s32 %s21, 1
    %s23 = scalar_select %p20, %s21, %s22
    %p26 = pneg %p20
    %p27 = scmp.eq.s32.totalorder %s11, 2
    %p28 = por %p26, %p27
    %p29 = scmp.ne.s32.totalorder %s21, %s24
    %p30 = scmp.eq.s32.totalorder %s11, 0
    %p31 = por %p29, %p30
    %p32 = scmp.ne.s32.totalorder %s21, %s24
    %p33 = scmp.eq.s32.totalorder %s16, 2
    %p34 = por %p32, %p33
    %p35 = scmp.ne.s32.totalorder %s24, %s25
    %p36 = scmp.eq.s32.totalorder %s16, 0
    %p37 = por %p35, %p36
    %p38 = scmp.ne.s32.totalorder %s24, %s25
    %p39 = scmp.eq.s32.totalorder %s17, 2
    %p40 = por %p38, %p39
    %p42 = scmp.ne.s32.totalorder %s25, %s41
    %p43 = scmp.eq.s32.totalorder %s17, 0
    %p44 = por %p42, %p43
    %s46 = sadd.s32 %s45, 1
    %p49 = scmp.eq.s32.totalorder %s11, 2
    %p50 = scmp.ne.s32.totalorder %s45, %s47
    %p51 = scmp.eq.s32.totalorder %s11, 0
    %p52 = por %p50, %p51
    %p53 = scmp.ne.s32.totalorder %s45, %s47
    %p54 = scmp.eq.s32.totalorder %s16, 2
    %p55 = por %p53, %p54
    %p56 = scmp.ne.s32.totalorder %s47, %s48
    %p57 = scmp.eq.s32.totalorder %s16, 0
    %p58 = por %p56, %p57
    %p59 = scmp.ne.s32.totalorder %s47, %s48
    %p60 = scmp.eq.s32.totalorder %s17, 2
    %p61 = por %p59, %p60
    %p63 = scmp.ne.s32.totalorder %s48, %s62
    %p64 = scmp.eq.s32.totalorder %s17, 0
    %p65 = por %p63, %p64
    %s67 = sadd.s32 %s66, 1
    %p70 = scmp.eq.s32.totalorder %s11, 2
    %p71 = scmp.ne.s32.totalorder %s66, %s68
    %p72 = scmp.eq.s32.totalorder %s11, 0
    %p73 = por %p71, %p72
    %p74 = scmp.ne.s32.totalorder %s66, %s68
    %p75 = scmp.eq.s32.totalorder %s16, 2
    %p76 = por %p74, %p75
    %p77 = scmp.ne.s32.totalorder %s68, %s69
    %p78 = scmp.eq.s32.totalorder %s16, 0
    %p79 = por %p77, %p78
    %p80 = scmp.ne.s32.totalorder %s68, %s69
    %p81 = scmp.eq.s32.totalorder %s17, 2
    %p82 = por %p80, %p81
    %p84 = scmp.ne.s32.totalorder %s69, %s83
    %p85 = scmp.eq.s32.totalorder %s17, 0
    %p86 = por %p84, %p85
    %s88 = sadd.s32 %s87, 1
    %p91 = scmp.eq.s32.totalorder %s11, 2
    %p92 = scmp.ne.s32.totalorder %s87, %s89
    %p93 = scmp.eq.s32.totalorder %s11, 0
    %p94 = por %p92, %p93
    %p95 = scmp.ne.s32.totalorder %s87, %s89
    %p96 = scmp.eq.s32.totalorder %s16, 2
    %p97 = por %p95, %p96
    %p98 = scmp.ne.s32.totalorder %s89, %s90
    %p99 = scmp.eq.s32.totalorder %s16, 0
    %p100 = por %p98, %p99
    %p101 = scmp.ne.s32.totalorder %s89, %s90
    %p102 = scmp.eq.s32.totalorder %s17, 2
    %p103 = por %p101, %p102
    %p105 = scmp.ne.s32.totalorder %s90, %s104
    %p106 = scmp.eq.s32.totalorder %s17, 0
    %p107 = por %p105, %p106
    %s109 = sadd.s32 %s108, 1
    %p112 = scmp.eq.s32.totalorder %s11, 2
    %p113 = scmp.ne.s32.totalorder %s108, %s110
    %p114 = scmp.eq.s32.totalorder %s11, 0
    %p115 = por %p113, %p114
    %p116 = scmp.ne.s32.totalorder %s108, %s110
    %p117 = scmp.eq.s32.totalorder %s16, 2
    %p118 = por %p116, %p117
    %p119 = scmp.ne.s32.totalorder %s110, %s111
    %p120 = scmp.eq.s32.totalorder %s16, 0
    %p121 = por %p119, %p120
    %p122 = scmp.ne.s32.totalorder %s110, %s111
    %p123 = scmp.eq.s32.totalorder %s17, 2
    %p124 = por %p122, %p123
    %p126 = scmp.ne.s32.totalorder %s111, %s125
    %p127 = scmp.eq.s32.totalorder %s17, 0
    %p128 = por %p126, %p127
    %s129 = ssub.s32 %s11, %s18
    %p130 = scmp.eq.s32.totalorder %s129, 0
    %s132 = sadd.s32 %s131, 1
    %s133 = scalar_select %p130, %s131, %s132
    %p136 = pneg %p130
    %p137 = scmp.eq.s32.totalorder %s11, 2
    %p138 = por %p136, %p137
    %p139 = scmp.ne.s32.totalorder %s131, %s134
    %p140 = scmp.eq.s32.totalorder %s11, 0
    %p141 = por %p139, %p140
    %p142 = scmp.ne.s32.totalorder %s131, %s134
    %p143 = scmp.eq.s32.totalorder %s16, 2
    %p144 = por %p142, %p143
    %p145 = scmp.ne.s32.totalorder %s134, %s135
    %p146 = scmp.eq.s32.totalorder %s16, 0
    %p147 = por %p145, %p146
    %p148 = scmp.ne.s32.totalorder %s134, %s135
    %p149 = scmp.eq.s32.totalorder %s17, 2
    %p150 = por %p148, %p149
    %p152 = scmp.ne.s32.totalorder %s135, %s151
    %p153 = scmp.eq.s32.totalorder %s17, 0
    %p154 = por %p152, %p153
    %p155 = scmp.le.s32.totalorder 1, %s11
    %p156 = scmp.lt.s32.totalorder %s11, 4
    %p157 = pnand %p155, %p156
    %p158 = pneg %p157
    // Predicated region
    $region9: #{mlp_forward.1} parent=5 // pred_check
      _
    $region10: #{mlp_forward.1} parent=5 // pred_check_branch
      %160 = sbr.rel (%p157) target = $region12
    $region11: #{mlp_forward.1} parent=5 // pred_region
      %s161 = ssub.s32 %s11, 1
      // Predicated region
      $region13: #{mlp_forward.1} parent=11 // pred_check
        %p162 = pneg %p58
      $region14: #{mlp_forward.1} parent=11 // pred_check_branch
        %164 = sbr.rel (%p162) target = $region16
      $region15: #{mlp_forward.1} parent=11 // pred_region
        _
      $region16: #{mlp_forward.1} parent=11 // pred_fallthru
        _
      // Predicated region
      $region17: #{mlp_forward.1} parent=11 // pred_check
        %p165 = pneg %p79
      $region18: #{mlp_forward.1} parent=11 // pred_check_branch
        %167 = sbr.rel (%p165) target = $region20
      $region19: #{mlp_forward.1} parent=11 // pred_region
        _
      $region20: #{mlp_forward.1} parent=11 // pred_fallthru
        _
      // Predicated region
      $region21: #{mlp_forward.1} parent=11 // pred_check
        %p168 = pneg %p100
      $region22: #{mlp_forward.1} parent=11 // pred_check_branch
        %170 = sbr.rel (%p168) target = $region24
      $region23: #{mlp_forward.1} parent=11 // pred_region
        _
      $region24: #{mlp_forward.1} parent=11 // pred_fallthru
        _
      // Predicated region
      $region25: #{mlp_forward.1} parent=11 // pred_check
        %p171 = pneg %p121
      $region26: #{mlp_forward.1} parent=11 // pred_check_branch
        %173 = sbr.rel (%p171) target = $region28
      $region27: #{mlp_forward.1} parent=11 // pred_region
        _
      $region28: #{mlp_forward.1} parent=11 // pred_fallthru
        _
    $region12: #{mlp_forward.1} parent=5 // pred_fallthru
      _
    %p174 = scmp.lt.s32.totalorder %s11, 3
    // Predicated region
    $region29: #{mlp_forward.1} parent=5 // pred_check
      %p175 = pneg %p174
    $region30: #{mlp_forward.1} parent=5 // pred_check_branch
      %177 = sbr.rel (%p175) target = $region32
    $region31: #{mlp_forward.1} parent=5 // pred_region
      // Predicated region
      $region33: #{mlp_forward.1} parent=31 // pred_check
        %p178 = pneg %p31
      $region34: #{mlp_forward.1} parent=31 // pred_check_branch
        %180 = sbr.rel (%p178) target = $region36
      $region35: #{mlp_forward.1} parent=31 // pred_region
        %s181 = smul.u32 4, %s11
        %p182 = scmp.lt.s32.totalorder %s181, 11
        %s183 = scalar_select %p182, %s181, 11
        %s184 = smul.addr %s183, 4
        %s185 = scalar_lea.vmem %s0, %s184
        %s186 = smul.u32 4, %s11
      $region36: #{mlp_forward.1} parent=31 // pred_fallthru
        _
    $region32: #{mlp_forward.1} parent=5 // pred_fallthru
      _
    %p187 = scmp.le.s32.totalorder 1, %s11
    %p188 = scmp.lt.s32.totalorder %s11, 4
    %p189 = pnand %p187, %p188
    %p190 = pneg %p189
    // Predicated region
    $region37: #{mlp_forward.1} parent=5 // pred_check
      _
    $region38: #{mlp_forward.1} parent=5 // pred_check_branch
      %192 = sbr.rel (%p189) target = $region40
    $region39: #{mlp_forward.1} parent=5 // pred_region
      %s193 = ssub.s32 %s11, 1
      %s194 = smul.u32 4, %s16
      %p195 = scmp.lt.s32.totalorder %s194, 11
      %s196 = scalar_select %p195, %s194, 11
      %s197 = smul.addr %s196, 4
      %s198 = scalar_lea.vmem %s0, %s197
      %p199 = pneg %p37
      %p200 = pneg %p34
      %p201 = pneg %p58
      %p202 = pneg %p55
      %p203 = pneg %p79
      %p204 = pneg %p76
      %p205 = pneg %p100
      %p206 = pneg %p97
      %p207 = pneg %p121
      %p208 = pneg %p118
      %p209 = pneg %p147
      %p210 = pneg %p144
      %s211 = smul.u32 4, %s16
      %p212 = scmp.lt.s32.totalorder %s211, 11
      %s213 = scalar_select %p212, %s211, 11
      %s214 = smul.addr %s213, 8
      %s215 = scalar_lea.vmem %s5, %s214
      %s216 = smul.u32 4, %s16
      %p217 = scmp.lt.s32.totalorder %s216, 11
      %s218 = scalar_select %p217, %s216, 11
      %s219 = smul.addr %s218, 4
      %s220 = scalar_lea.vmem %s0, %s219
      %s221 = smul.u32 4, %s16
      %s222 = smul.u32 4, %s16
      %p223 = scmp.lt.s32.totalorder %s222, 11
      %s224 = scalar_select %p223, %s222, 11
      %s225 = smul.addr %s224, 8
      %s226 = scalar_lea.vmem %s5, %s225
      %s227 = smul.u32 4, %s16
      %v229 = vld [vmem:[%s220] sm:$0xf]
      %v230 = vld [vmem:[%s220 + $0x4] sm:$0xf]
      %v231 = vld [vmem:[%s220 + $0x8] sm:$0xf]
      %v232 = vld [vmem:[%s220 + $0xc] sm:$0xf]
      %v233 = vld [vmem:[%s1] sm:$0xff]
      %v234 = vld [vmem:[%s1 + $0x8] sm:$0xff]
      %v235 = vld [vmem:[%s1 + $0x10] sm:$0x33]
      %v236 = vld [vmem:[%s2] sm:$0x3]
      %v238 = vperm.slane %v236, 0
      %v239 = vperm.slane %v236, 1
      %v246 = vunpack.c.l.b16 %v229
      %v247 = vunpack.c.l.b16 %v230
      %v248 = vunpack.c.l.b16 %v231
      %v249 = vunpack.c.l.b16 %v232
      %v250 = vpack.c.b16 %v247, %v246
      %v251 = vpack.c.b16 %v249, %v248
      %v255 = vunpack.c.l.b16 %v233
      %v256 = vunpack.c.h.b16 %v233
      %v257 = vunpack.c.l.b16 %v234
      %v258 = vunpack.c.h.b16 %v234
      %v259 = vunpack.c.l.b16 %v235
      %v260 = vunpack.c.h.b16 %v235
      %v261 = vpack.c.b16 %v257, %v255
      %v262 = vpack.c.b16 %v258, %v256
      %v263 = vpack.c.b16 %v259, %v259
      %v264 = vpack.c.b16 %v260, %v260
      %vm267 = vcmask 162816
      %v269 = vsel %vm267, %v250, 0
      %v272 = vsel %vm267, %v251, 0
      %vm274 = vcmask 1041408
      %v276 = vsel %vm274, %v263, 0
      %v279 = vsel %vm274, %v264, 0
      %281 = vmatpush.bf16.msra.mxu0 0
      %282 = vmatpush.bf16.msra.mxu0 0
      %283 = vmatpush.bf16.msra.mxu0 0
      %284 = vmatpush.bf16.msra.mxu0 0
      %285 = vmatpush.bf16.msra.mxu0 0
      %286 = vmatpush.bf16.msra.mxu0 0
      %287 = vmatpush.bf16.msra.mxu0 %v276
      %288 = vmatpush.bf16.msra.mxu0 %v261
      %289 = vmatmul.bf16.gmra.mxu0 %v269
      %v290 = vpop.f32.mrf.mxu0
      %v291 = vadd.f32 %v238, %v290
      %v292 = vpop.f32.mrf.mxu0
      %v293 = vadd.f32 %v238, %v292
      %294 = vmatmul.bf16.gmra.mxu0 %v272
      %v295 = vpop.f32.mrf.mxu0
      %v296 = vadd.f32 %v238, %v295
      %v297 = vpop.f32.mrf.mxu0
      %v298 = vadd.f32 %v238, %v297
      %299 = vdwg.mxu0
      %300 = vmatpush.bf16.msra.mxu0 0
      %301 = vmatpush.bf16.msra.mxu0 0
      %302 = vmatpush.bf16.msra.mxu0 0
      %303 = vmatpush.bf16.msra.mxu0 0
      %304 = vmatpush.bf16.msra.mxu0 0
      %305 = vmatpush.bf16.msra.mxu0 0
      %306 = vmatpush.bf16.msra.mxu0 %v279
      %307 = vmatpush.bf16.msra.mxu0 %v262
      %308 = vmatmul.bf16.gmra.mxu0 %v269
      %v309 = vpop.f32.mrf.mxu0
      %v310 = vadd.f32 %v239, %v309
      %v311 = vpop.f32.mrf.mxu0
      %v312 = vadd.f32 %v239, %v311
      %313 = vmatmul.bf16.gmra.mxu0 %v272
      %v314 = vpop.f32.mrf.mxu0
      %v315 = vadd.f32 %v239, %v314
      %v316 = vpop.f32.mrf.mxu0
      %v317 = vadd.f32 %v239, %v316
      %318 = vdwg.mxu0
      %v319 = vmax.f32 %v291, 0.0
      %v320 = vmax.f32 %v310, 0.0
      %v321 = vmax.f32 %v293, 0.0
      %v322 = vmax.f32 %v312, 0.0
      %v323 = vmax.f32 %v296, 0.0
      %v324 = vmax.f32 %v315, 0.0
      %v325 = vmax.f32 %v298, 0.0
      %v326 = vmax.f32 %v317, 0.0
      %v327 = vpack.c.bf16 %v321, %v319
      %v328 = vpack.c.bf16 %v322, %v320
      %v329 = vpack.c.bf16 %v325, %v323
      %v330 = vpack.c.bf16 %v326, %v324
      %v331 = vld [vmem:[%s3] sm:$0xf]
      %v332 = vld [vmem:[%s3 + $0x4] sm:$0xf]
      %v333 = vld [vmem:[%s3 + $0x8] sm:$0xf]
      %v334 = vld [vmem:[%s3 + $0xc] sm:$0xf]
      %v335 = vld [vmem:[%s3 + $0x10] sm:$0xf]
      %v336 = vld [vmem:[%s3 + $0x14] sm:$0xf]
      %v337 = vld [vmem:[%s3 + $0x18] sm:$0xf]
      %v338 = vld [vmem:[%s3 + $0x1c] sm:$0xf]
      %v339 = vld [vmem:[%s3 + $0x20] sm:$0xf]
      %v340 = vld [vmem:[%s3 + $0x24] sm:$0xf]
      %v341 = vld [vmem:[%s3 + $0x28] sm:$0xf]
      %v342 = vld [vmem:[%s3 + $0x2c] sm:$0xf]
      %v343 = vld [vmem:[%s3 + $0x30] sm:$0xf]
      %v344 = vld [vmem:[%s3 + $0x34] sm:$0xf]
      %v345 = vld [vmem:[%s3 + $0x38] sm:$0xf]
      %v346 = vld [vmem:[%s3 + $0x3c] sm:$0xf]
      %v347 = vld [vmem:[%s3 + $0x40] sm:$0xf]
      %v348 = vld [vmem:[%s3 + $0x44] sm:$0xf]
      %v349 = vld [vmem:[%s3 + $0x48] sm:$0xf]
      %v350 = vld [vmem:[%s3 + $0x4c] sm:$0xf]
      %v351 = vld [vmem:[%s3 + $0x50] sm:$0xf]
      %v352 = vld [vmem:[%s3 + $0x54] sm:$0xf]
      %v353 = vld [vmem:[%s3 + $0x58] sm:$0xf]
      %v354 = vld [vmem:[%s3 + $0x5c] sm:$0xf]
      %v355 = vld [vmem:[%s3 + $0x60] sm:$0xf]
      %v356 = vld [vmem:[%s3 + $0x64] sm:$0xf]
      %v357 = vld [vmem:[%s3 + $0x68] sm:$0xf]
      %v358 = vld [vmem:[%s3 + $0x6c] sm:$0xf]
      %v359 = vld [vmem:[%s3 + $0x70] sm:$0xf]
      %v360 = vld [vmem:[%s3 + $0x74] sm:$0xf]
      %v361 = vld [vmem:[%s3 + $0x78] sm:$0xf]
      %v362 = vld [vmem:[%s3 + $0x7c] sm:$0xf]
      %v363 = vld [vmem:[%s4] sm:$0x1]
      %v365 = vperm.slane %v363, 0
      %v399 = vunpack.c.l.b16 %v331
      %v400 = vunpack.c.l.b16 %v332
      %v401 = vunpack.c.l.b16 %v333
      %v402 = vunpack.c.l.b16 %v334
      %v403 = vunpack.c.l.b16 %v335
      %v404 = vunpack.c.l.b16 %v336
      %v405 = vunpack.c.l.b16 %v337
      %v406 = vunpack.c.l.b16 %v338
      %v407 = vunpack.c.l.b16 %v339
      %v408 = vunpack.c.l.b16 %v340
      %v409 = vunpack.c.l.b16 %v341
      %v410 = vunpack.c.l.b16 %v342
      %v411 = vunpack.c.l.b16 %v343
      %v412 = vunpack.c.l.b16 %v344
      %v413 = vunpack.c.l.b16 %v345
      %v414 = vunpack.c.l.b16 %v346
      %v415 = vunpack.c.l.b16 %v347
      %v416 = vunpack.c.l.b16 %v348
      %v417 = vunpack.c.l.b16 %v349
      %v418 = vunpack.c.l.b16 %v350
      %v419 = vunpack.c.l.b16 %v351
      %v420 = vunpack.c.l.b16 %v352
      %v421 = vunpack.c.l.b16 %v353
      %v422 = vunpack.c.l.b16 %v354
      %v423 = vunpack.c.l.b16 %v355
      %v424 = vunpack.c.l.b16 %v356
      %v425 = vunpack.c.l.b16 %v357
      %v426 = vunpack.c.l.b16 %v358
      %v427 = vunpack.c.l.b16 %v359
      %v428 = vunpack.c.l.b16 %v360
      %v429 = vunpack.c.l.b16 %v361
      %v430 = vunpack.c.l.b16 %v362
      %v431 = vpack.c.b16 %v400, %v399
      %v432 = vpack.c.b16 %v402, %v401
      %v433 = vpack.c.b16 %v404, %v403
      %v434 = vpack.c.b16 %v406, %v405
      %v435 = vpack.c.b16 %v408, %v407
      %v436 = vpack.c.b16 %v410, %v409
      %v437 = vpack.c.b16 %v412, %v411
      %v438 = vpack.c.b16 %v414, %v413
      %v439 = vpack.c.b16 %v416, %v415
      %v440 = vpack.c.b16 %v418, %v417
      %v441 = vpack.c.b16 %v420, %v419
      %v442 = vpack.c.b16 %v422, %v421
      %v443 = vpack.c.b16 %v424, %v423
      %v444 = vpack.c.b16 %v426, %v425
      %v445 = vpack.c.b16 %v428, %v427
      %v446 = vpack.c.b16 %v430, %v429
      %463 = vmatpush.bf16.msra.mxu0 %v438
      %464 = vmatpush.bf16.msra.mxu0 %v437
      %465 = vmatpush.bf16.msra.mxu0 %v436
      %466 = vmatpush.bf16.msra.mxu0 %v435
      %467 = vmatpush.bf16.msra.mxu0 %v434
      %468 = vmatpush.bf16.msra.mxu0 %v433
      %469 = vmatpush.bf16.msra.mxu0 %v432
      %470 = vmatpush.bf16.msra.mxu0 %v431
      %471 = vmatmul.bf16.gmra.mxu0 %v327
      %v472 = vpop.f32.mrf.mxu0
      %v473 = vadd.f32 %v365, %v472
      %v474 = vpop.f32.mrf.mxu0
      %v475 = vadd.f32 %v365, %v474
      %476 = vmatmul.bf16.gmra.mxu0 %v329
      %v477 = vpop.f32.mrf.mxu0
      %v478 = vadd.f32 %v365, %v477
      %v479 = vpop.f32.mrf.mxu0
      %v480 = vadd.f32 %v365, %v479
      %481 = vdwg.mxu0
      %482 = vmatpush.bf16.msra.mxu0 %v446
      %483 = vmatpush.bf16.msra.mxu0 %v445
      %484 = vmatpush.bf16.msra.mxu0 %v444
      %485 = vmatpush.bf16.msra.mxu0 %v443
      %486 = vmatpush.bf16.msra.mxu0 %v442
      %487 = vmatpush.bf16.msra.mxu0 %v441
      %488 = vmatpush.bf16.msra.mxu0 %v440
      %489 = vmatpush.bf16.msra.mxu0 %v439
      %490 = vmatmul.bf16.gmra.mxu0 %v328
      %v491 = vpop.f32.mrf.mxu0
      %v492 = vadd.f32 %v473, %v491
      %v493 = vpop.f32.mrf.mxu0
      %v494 = vadd.f32 %v475, %v493
      %495 = vmatmul.bf16.gmra.mxu0 %v330
      %v496 = vpop.f32.mrf.mxu0
      %v497 = vadd.f32 %v478, %v496
      %v498 = vpop.f32.mrf.mxu0
      %v499 = vadd.f32 %v480, %v498
      %500 = vdwg.mxu0
      %501 = vst [vmem:[%s226] sm:$0xff] %v492
      %502 = vst [vmem:[%s226 + $0x8] sm:$0xff] %v494
      %503 = vst [vmem:[%s226 + $0x10] sm:$0xff] %v497
      %504 = vst [vmem:[%s226 + $0x18] sm:$0xff] %v499
      %s505 = smul.u32 4, %s16
      %p506 = scmp.lt.s32.totalorder %s505, 11
      %s507 = scalar_select %p506, %s505, 11
      %s508 = smul.addr %s507, 8
      %s509 = scalar_lea.vmem %s5, %s508
      // Predicated region
      $region41: #{mlp_forward.1} parent=39 // pred_check
        %p510 = pneg %p144
      $region42: #{mlp_forward.1} parent=39 // pred_check_branch
        %512 = sbr.rel (%p510) target = $region44
      $region43: #{mlp_forward.1} parent=39 // pred_region
        %s513 = smul.u32 4, %s16
      $region44: #{mlp_forward.1} parent=39 // pred_fallthru
        _
    $region40: #{mlp_forward.1} parent=5 // pred_fallthru
      _
    %p514 = scmp.le.s32.totalorder 2, %s11
    // Predicated region
    $region45: #{mlp_forward.1} parent=5 // pred_check
      %p515 = pneg %p514
    $region46: #{mlp_forward.1} parent=5 // pred_check_branch
      %517 = sbr.rel (%p515) target = $region48
    $region47: #{mlp_forward.1} parent=5 // pred_region
      %s518 = ssub.s32 %s11, 2
      // Predicated region
      $region49: #{mlp_forward.1} parent=47 // pred_check
        %p519 = pneg %p150
      $region50: #{mlp_forward.1} parent=47 // pred_check_branch
        %521 = sbr.rel (%p519) target = $region52
      $region51: #{mlp_forward.1} parent=47 // pred_region
        %s522 = smul.u32 4, %s17
        %p523 = scmp.lt.s32.totalorder %s522, 11
        %s524 = scalar_select %p523, %s522, 11
        %s525 = smul.addr %s524, 8
        %s526 = scalar_lea.vmem %s5, %s525
      $region52: #{mlp_forward.1} parent=47 // pred_fallthru
        _
    $region48: #{mlp_forward.1} parent=5 // pred_fallthru
      _
  $region6: #{mlp_forward.1} parent=0 // loop_footer
    %s15 = sadd.s32 1, %s11
  $region7: #{mlp_forward.1} parent=0 // loop_footer_branch
    %10 = sbr.rel target = $region3
  $region8: #{mlp_forward.1} parent=0 // loop_exit
    _

</llo_original>
